<compile_context>
chip_gen: v7x
topology: tpu7x:2x2x1
jax: 0.10.0
libtpu: 0.0.40
codegen_flags: <defaults>
</compile_context>

<pallas_src>
import functools

import jax
import jax.numpy as jnp
from jax.experimental import pallas as pl
from jax.experimental.pallas import tpu as pltpu


def _focal_loss_kernel(preds_ref, labels_ref, alpha_ref, out_ref, *, gamma):
    j = pl.program_id(1)

    # Output block is resident across the "arbitrary" axis (same block index
    # for every j): zero it once, accumulate into it directly (no scratch).
    @pl.when(j == 0)
    def _():
        out_ref[...] = jnp.zeros_like(out_ref)

    x = preds_ref[...].astype(jnp.float32)              # (C, BN) logits
    lbl = labels_ref[...]                                # (1, BN) int32 labels (pad = C)
    alpha_vec = alpha_ref[...].astype(jnp.float32)       # (C, 1) per-class alpha

    # Stable softmax pieces along the (small) class/sublane axis.
    m = jnp.max(x, axis=0, keepdims=True)                # (1, BN)
    z = x - m                                            # (C, BN)
    ez = jnp.exp(z)                                      # (C, BN)  (the only full exp)
    e_sum = jnp.sum(ez, axis=0, keepdims=True)           # (1, BN)
    lse = jnp.log(e_sum)                                 # (1, BN)

    # One-hot sublane mask for the label class; all-false on padded / OOR lanes.
    cls = jax.lax.broadcasted_iota(jnp.int32, x.shape, 0)   # (C, BN)
    onehot = cls == lbl                                      # (C, BN)
    z_y = jnp.sum(jnp.where(onehot, z, 0.0), axis=0, keepdims=True)        # (1, BN)
    e_y = jnp.sum(jnp.where(onehot, ez, 0.0), axis=0, keepdims=True)       # (1, BN)
    alpha_t = jnp.sum(jnp.where(onehot, alpha_vec, 0.0), axis=0, keepdims=True)  # (1, BN)

    logpt = z_y - lse                                    # log p_t
    pt = e_y / e_sum                                     # p_t (reuses exp(z); no 2nd exp)

    nll = -alpha_t * logpt                               # weighted NLL, reduction='none'
    one_m_pt = jnp.maximum(1.0 - pt, 0.0)                # clamp: rounding can give pt>1
    if float(gamma) == int(gamma) and int(gamma) >= 0:   # integer gamma -> pure VPU muls
        focal = jnp.ones_like(one_m_pt)
        for _ in range(int(gamma)):
            focal = focal * one_m_pt
    else:                                                # non-integer gamma -> (1, BN) pow
        focal = one_m_pt ** jnp.float32(gamma)
    loss = focal * nll                                   # (1, BN); 0 on padded lanes

    # Per-lane accumulation straight into the resident output block.
    out_ref[...] = out_ref[...] + loss


def _num_tensorcores_per_chip():
    """Best-effort detection; default to 1 (safe: 'parallel' axis is optional)."""
    try:
        kind = jax.devices()[0].device_kind.lower()
    except Exception:  # pragma: no cover
        return 1
    if any(tag in kind for tag in ("v7", "v4", "v5p")):
        return 2
    return 1


def focal_loss(preds, labels, alpha, *, gamma=2, size_average=True,
               block_n=None, num_parallel=None):
    """preds: (N, C) float, labels: (N,) int, alpha: (C,) float -> scalar f32."""
    N, C = preds.shape
    n128 = -(-N // 128) * 128

    # ---- tile / grid selection -------------------------------------------
    auto_block = block_n is None
    if auto_block:
        itemsize = jnp.dtype(preds.dtype).itemsize
        # Count every stream per lane, double-buffered: logits + labels + out.
        bytes_per_lane = 2 * C * itemsize + 2 * 4 + 2 * 4
        budget = 12 * 1024 * 1024          # fits v5e's 16 MiB scoped default too
        block_n = max(128, min(256 * 1024, (budget // bytes_per_lane) // 128 * 128))
    block_n = min(block_n, n128)
    block_n = max(128, (block_n // 128) * 128)

    if num_parallel is None:
        num_parallel = 2 if (_num_tensorcores_per_chip() >= 2 and n128 >= 256) else 1

    if auto_block and num_parallel > 1:
        # Keep both TensorCores busy with >=2 steps each when there is enough work.
        per_core = (n128 // (num_parallel * 2)) // 128 * 128
        if per_core >= 128:
            block_n = min(block_n, per_core)

    steps_total = -(-n128 // block_n)
    if steps_total < num_parallel:
        num_parallel = 1
    steps = -(-steps_total // num_parallel)
    n_pad = num_parallel * steps * block_n
    assert block_n % 128 == 0

    # ---- operand staging (lane-dense (C, N) layout) ------------------------
    preds_t = jnp.pad(jnp.transpose(preds), ((0, 0), (0, n_pad - N)))
    labels_i = labels.astype(jnp.int32)
    # Pad with the out-of-range label C -> one-hot mask all-false -> zero loss.
    labels_p = jnp.pad(labels_i, (0, n_pad - N), constant_values=C).reshape(1, n_pad)
    alpha_2d = alpha.astype(jnp.float32).reshape(C, 1)

    kernel = functools.partial(_focal_loss_kernel, gamma=gamma)

    partials = pl.pallas_call(
        kernel,
        out_shape=jax.ShapeDtypeStruct((num_parallel, 1, block_n), jnp.float32),
        grid=(num_parallel, steps),
        in_specs=[
            pl.BlockSpec((C, block_n), lambda p, j: (0, p * steps + j)),  # logits tile
            pl.BlockSpec((1, block_n), lambda p, j: (0, p * steps + j)),  # labels tile
            pl.BlockSpec((C, 1), lambda p, j: (0, 0)),                    # per-class alpha
        ],
        out_specs=pl.BlockSpec((1, 1, block_n), lambda p, j: (p, 0, 0)),  # per-core lane sums
        compiler_params=pltpu.CompilerParams(
            dimension_semantics=("parallel", "arbitrary"),
            vmem_limit_bytes=32 * 1024 * 1024),
    )(preds_t, labels_p, alpha_2d)

    total = jnp.sum(partials)
    return total / N if size_average else total


def focal_loss_ref(preds, labels, alpha, *, gamma=2, size_average=True):
    """Pure-JAX reference matching the PyTorch module semantics."""
    log_soft = jax.nn.log_softmax(preds.astype(jnp.float32), axis=1)
    pt = jnp.take_along_axis(jnp.exp(log_soft), labels[:, None], axis=1)
    logpt = jnp.take_along_axis(log_soft, labels[:, None], axis=1)
    nll = -alpha[labels][:, None] * logpt
    loss = ((1.0 - pt) ** gamma) * nll
    return loss.mean() if size_average else loss.sum()


if __name__ == "__main__":
    # Deterministic setup mirroring FocalLoss.__init__(alpha=0.25, num_classes=3)
    num_classes = 3
    alpha_scalar = 0.25
    gamma = 2
    alpha = jnp.concatenate(
        [jnp.array([alpha_scalar], jnp.float32),
         jnp.full((num_classes - 1,), 1.0 - alpha_scalar, jnp.float32)]
    )  # -> [0.25, 0.75, 0.75]

    key = jax.random.PRNGKey(0)
    kp, kl = jax.random.split(key)
    N = 16
    preds = jax.random.normal(kp, (N, num_classes), dtype=jnp.float32)
    labels = jax.random.randint(kl, (N,), 0, num_classes, dtype=jnp.int32)

    # jit the whole wrapper so the transpose/pad staging fuses into one pass.
    loss_mean = jax.jit(functools.partial(focal_loss, gamma=gamma, size_average=True))
    out = jax.block_until_ready(loss_mean(preds, labels, alpha))
    ref = focal_loss_ref(preds, labels, alpha, gamma=gamma, size_average=True)
    assert jnp.allclose(out, ref, rtol=1e-5, atol=1e-6), (out, ref)

    # Second check: non-multiple N with a multi-step, 2-way-parallel grid
    # (exercises padding w/ out-of-range labels, resident-output accumulation,
    # and the parallel axis even on single-TC chips where it is serialized).
    kp2, kl2 = jax.random.split(jax.random.PRNGKey(0), 2)
    N2 = 1000
    preds2 = jax.random.normal(kp2, (N2, num_classes), dtype=jnp.float32)
    labels2 = jax.random.randint(kl2, (N2,), 0, num_classes, dtype=jnp.int32)
    loss_sum = jax.jit(functools.partial(focal_loss, gamma=gamma, size_average=False,
                                         block_n=128, num_parallel=2))
    out2 = jax.block_until_ready(loss_sum(preds2, labels2, alpha))
    ref2 = focal_loss_ref(preds2, labels2, alpha, gamma=gamma, size_average=False)
    assert jnp.allclose(out2, ref2, rtol=1e-5, atol=1e-5), (out2, ref2)

    # Third check: bf16 logits + large-N auto tiling path (big block_n).
    N3 = 40000
    preds3 = jax.random.normal(jax.random.PRNGKey(3), (N3, num_classes),
                               dtype=jnp.float32).astype(jnp.bfloat16)
    labels3 = jax.random.randint(jax.random.PRNGKey(4), (N3,), 0, num_classes,
                                 dtype=jnp.int32)
    out3 = jax.block_until_ready(loss_mean(preds3, labels3, alpha))
    ref3 = focal_loss_ref(preds3.astype(jnp.float32), labels3, alpha,
                          gamma=gamma, size_average=True)
    assert jnp.allclose(out3, ref3, rtol=2e-2, atol=1e-3), (out3, ref3)

    print("KERNEL_OK")
</pallas_src>

<mosaic_0001>
module attributes {stable_mosaic.version = 11 : i64} {
  func.func @_focal_loss_kernel(%arg0: i32, %arg1: i32, %arg2: memref<3x128xf32, #tpu.memory_space<vmem>>, %arg3: memref<1x128xi32, #tpu.memory_space<vmem>>, %arg4: memref<3x1xf32, #tpu.memory_space<vmem>>, %arg5: memref<1x1x128xf32, #tpu.memory_space<vmem>>) attributes {dimension_semantics = [#tpu.dimension_semantics<parallel>, #tpu.dimension_semantics<arbitrary>], iteration_bounds = array<i64: 1, 1>, scalar_prefetch = 0 : i64, scratch_operands = 0 : i64, tpu.core_type = #tpu.core_type<tc>, window_params = [{transform_indices = @transform_0, window_bounds = array<i64: 3, 128>}, {transform_indices = @transform_1, window_bounds = array<i64: 1, 128>}, {pipeline_mode = #tpu.pipeline_mode<synchronous>, transform_indices = @transform_2, window_bounds = array<i64: 3, 1>}, {transform_indices = @transform_3, window_bounds = array<i64: 1, 1, 128>}]} {
    %c0_i32 = arith.constant 0 : i32
    %0 = arith.cmpi eq, %arg1, %c0_i32 : i32
    %1 = arith.extui %0 : i1 to i32
    %c0_i32_0 = arith.constant 0 : i32
    %2 = arith.cmpi ne, %1, %c0_i32_0 : i32
    scf.if %2 {
      %cst_23 = arith.constant 0.000000e+00 : f32
      %48 = vector.broadcast %cst_23 : f32 to vector<1x1x128xf32>
      %c0_24 = arith.constant 0 : index
      %c0_25 = arith.constant 0 : index
      %c0_26 = arith.constant 0 : index
      %49 = vector.load %arg5[%c0_24, %c0_25, %c0_26] : memref<1x1x128xf32, #tpu.memory_space<vmem>>, vector<1x1x128xf32>
      tpu.vector_store %arg5[%c0_24, %c0_25, %c0_26], %48 {strides = array<i32>} : memref<1x1x128xf32, #tpu.memory_space<vmem>>, vector<1x1x128xf32>,
    } else {
    }
    %c0 = arith.constant 0 : index
    %c0_1 = arith.constant 0 : index
    %3 = vector.load %arg2[%c0, %c0_1] : memref<3x128xf32, #tpu.memory_space<vmem>>, vector<3x128xf32>
    %c0_2 = arith.constant 0 : index
    %c0_3 = arith.constant 0 : index
    %4 = vector.load %arg3[%c0_2, %c0_3] : memref<1x128xi32, #tpu.memory_space<vmem>>, vector<1x128xi32>
    %c0_4 = arith.constant 0 : index
    %c0_5 = arith.constant 0 : index
    %5 = vector.load %arg4[%c0_4, %c0_5] : memref<3x1xf32, #tpu.memory_space<vmem>>, vector<3x1xf32>
    %cst = arith.constant dense<0xFF800000> : vector<128xf32>
    %6 = vector.multi_reduction <maximumf>, %3, %cst [0] : vector<3x128xf32> to vector<128xf32>
    %7 = vector.shape_cast %6 : vector<128xf32> to vector<1x128xf32>
    %8 = vector.broadcast %7 : vector<1x128xf32> to vector<3x128xf32>
    %9 = arith.subf %3, %8 : vector<3x128xf32>
    %10 = math.exp %9 : vector<3x128xf32>
    %cst_6 = arith.constant dense<0.000000e+00> : vector<128xf32>
    %11 = vector.multi_reduction <add>, %10, %cst_6 [0] : vector<3x128xf32> to vector<128xf32>
    %12 = vector.shape_cast %11 : vector<128xf32> to vector<1x128xf32>
    %13 = math.log %12 : vector<1x128xf32>
    %14 = tpu.iota {dimensions = array<i32: 0>} : vector<3x128xi32>
    %15 = vector.broadcast %4 : vector<1x128xi32> to vector<3x128xi32>
    %16 = arith.cmpi eq, %14, %15 : vector<3x128xi32>
    %cst_7 = arith.constant 0.000000e+00 : f32
    %17 = vector.broadcast %cst_7 : f32 to vector<3x128xf32>
    %18 = arith.select %16, %9, %17 : vector<3x128xi1>, vector<3x128xf32>
    %cst_8 = arith.constant dense<0.000000e+00> : vector<128xf32>
    %19 = vector.multi_reduction <add>, %18, %cst_8 [0] : vector<3x128xf32> to vector<128xf32>
    %20 = vector.shape_cast %19 : vector<128xf32> to vector<1x128xf32>
    %cst_9 = arith.constant 0.000000e+00 : f32
    %21 = vector.broadcast %cst_9 : f32 to vector<3x128xf32>
    %22 = arith.select %16, %10, %21 : vector<3x128xi1>, vector<3x128xf32>
    %cst_10 = arith.constant dense<0.000000e+00> : vector<128xf32>
    %23 = vector.multi_reduction <add>, %22, %cst_10 [0] : vector<3x128xf32> to vector<128xf32>
    %24 = vector.shape_cast %23 : vector<128xf32> to vector<1x128xf32>
    %cst_11 = arith.constant 0.000000e+00 : f32
    %25 = vector.shape_cast %5 : vector<3x1xf32> to vector<3x1xf32>
    %26 = vector.broadcast %25 : vector<3x1xf32> to vector<3x128xf32>
    %27 = vector.broadcast %cst_11 : f32 to vector<3x128xf32>
    %28 = arith.select %16, %26, %27 : vector<3x128xi1>, vector<3x128xf32>
    %cst_12 = arith.constant dense<0.000000e+00> : vector<128xf32>
    %29 = vector.multi_reduction <add>, %28, %cst_12 [0] : vector<3x128xf32> to vector<128xf32>
    %30 = vector.shape_cast %29 : vector<128xf32> to vector<1x128xf32>
    %31 = arith.subf %20, %13 : vector<1x128xf32>
    %32 = arith.divf %24, %12 : vector<1x128xf32>
    %cst_13 = arith.constant 0.000000e+00 : f32
    %33 = vector.broadcast %cst_13 : f32 to vector<1x128xf32>
    %34 = arith.subf %33, %30 : vector<1x128xf32>
    %35 = arith.mulf %34, %31 : vector<1x128xf32>
    %cst_14 = arith.constant 1.000000e+00 : f32
    %36 = vector.broadcast %cst_14 : f32 to vector<1x128xf32>
    %37 = arith.subf %36, %32 : vector<1x128xf32>
    %cst_15 = arith.constant 0.000000e+00 : f32
    %38 = vector.broadcast %cst_15 : f32 to vector<1x128xf32>
    %39 = arith.maximumf %37, %38 : vector<1x128xf32>
    %cst_16 = arith.constant 1.000000e+00 : f32
    %40 = vector.broadcast %cst_16 : f32 to vector<1x128xf32>
    %41 = arith.mulf %40, %39 : vector<1x128xf32>
    %42 = arith.mulf %41, %39 : vector<1x128xf32>
    %43 = arith.mulf %42, %35 : vector<1x128xf32>
    %c0_17 = arith.constant 0 : index
    %c0_18 = arith.constant 0 : index
    %c0_19 = arith.constant 0 : index
    %44 = vector.load %arg5[%c0_17, %c0_18, %c0_19] : memref<1x1x128xf32, #tpu.memory_space<vmem>>, vector<1x1x128xf32>
    %45 = vector.shape_cast %43 : vector<1x128xf32> to vector<1x1x128xf32>
    %46 = arith.addf %44, %45 : vector<1x1x128xf32>
    %c0_20 = arith.constant 0 : index
    %c0_21 = arith.constant 0 : index
    %c0_22 = arith.constant 0 : index
    %47 = vector.load %arg5[%c0_20, %c0_21, %c0_22] : memref<1x1x128xf32, #tpu.memory_space<vmem>>, vector<1x1x128xf32>
    tpu.vector_store %arg5[%c0_20, %c0_21, %c0_22], %46 {strides = array<i32>} : memref<1x1x128xf32, #tpu.memory_space<vmem>>, vector<1x1x128xf32>,
    return
  }
  func.func @transform_0(%arg0: i32, %arg1: i32) -> (i32, i32) {
    %c1_i32 = arith.constant 1 : i32
    %0 = arith.muli %arg0, %c1_i32 : i32
    %1 = arith.addi %0, %arg1 : i32
    %c0_i32 = arith.constant 0 : i32
    %c0_i32_0 = arith.constant 0 : i32
    return %c0_i32, %1 : i32, i32
  }
  func.func @transform_1(%arg0: i32, %arg1: i32) -> (i32, i32) {
    %c1_i32 = arith.constant 1 : i32
    %0 = arith.muli %arg0, %c1_i32 : i32
    %1 = arith.addi %0, %arg1 : i32
    %c0_i32 = arith.constant 0 : i32
    %c0_i32_0 = arith.constant 0 : i32
    return %c0_i32, %1 : i32, i32
  }
  func.func @transform_2(%arg0: i32, %arg1: i32) -> (i32, i32) {
    %c0_i32 = arith.constant 0 : i32
    %c0_i32_0 = arith.constant 0 : i32
    %c0_i32_1 = arith.constant 0 : i32
    return %c0_i32, %c0_i32_0 : i32, i32
  }
  func.func @transform_3(%arg0: i32, %arg1: i32) -> (i32, i32, i32) {
    %c0_i32 = arith.constant 0 : i32
    %c0_i32_0 = arith.constant 0 : i32
    %c0_i32_1 = arith.constant 0 : i32
    return %arg0, %c0_i32, %c0_i32_0 : i32, i32, i32
  }
}

</mosaic_0001>

<llo_original>
// kernel: focal_loss.1
$region0: #{focal_loss.1}
  #allocation0 [shape = 'u32[]', space=smem, size = 0x4, offset = 0x4, fixed_abs, tag = 'smem constant byte address 0x4 - core index']
  #allocation1 [shape = 'u32[144,128]{1,0:T(1,128)}', space=vmem, size = 0x12000, scoped, tag = 'internal scratch']
  %s0 = inlined_call_operand.vmem [shape: f32[3,128], index: 0, kind: input, shape index: {}]
  %s1 = inlined_call_operand.vmem [shape: s32[1,128], index: 1, kind: input, shape index: {}]
  %s2 = inlined_call_operand.vmem [shape: f32[3,1], index: 2, kind: input, shape index: {}]
  %s3 = inlined_call_operand.vmem [shape: f32[1,1,128], index: 3, kind: output, shape index: {}]
  %s4 = sld [smem:[#allocation0]]
  $region26: #{focal_loss.1} parent=0
    _
  %s6 = ssub.s32 1, %s4
  %s7 = scalar_select 0, %s6, %s4
  // Predicated region
  $region2: #{focal_loss.1} parent=0 // pred_check
    _
  $region3: #{focal_loss.1} parent=0 // pred_check_branch
    %9 = sbr.rel (0) target = $region5
  $region4: #{focal_loss.1} parent=0 // pred_region
    %s10 = sadd.s32 0, 0
    %p11 = scmp.lt.s32.totalorder %s10, 0
    %s12 = scalar_select %p11, %s10, 0
    %s13 = smul.addr %s12, 4
    %s14 = scalar_lea.vmem %s0, %s13
    %s15 = sadd.s32 0, 0
  $region5: #{focal_loss.1} parent=0 // pred_fallthru
    _
  // Predicated region
  $region6: #{focal_loss.1} parent=0 // pred_check
    _
  $region7: #{focal_loss.1} parent=0 // pred_check_branch
    %17 = sbr.rel (0) target = $region9
  $region8: #{focal_loss.1} parent=0 // pred_region
    %s18 = sadd.s32 0, 0
    %p19 = scmp.lt.s32.totalorder %s18, 0
    %s20 = scalar_select %p19, %s18, 0
    %s21 = scalar_lea.vmem %s1, %s20
    %s22 = sadd.s32 0, 0
  $region9: #{focal_loss.1} parent=0 // pred_fallthru
    _
  // Predicated region
  $region10: #{focal_loss.1} parent=0 // pred_check
    _
  $region11: #{focal_loss.1} parent=0 // pred_check_branch
    %24 = sbr.rel (0) target = $region13
  $region12: #{focal_loss.1} parent=0 // pred_region
    _
  $region13: #{focal_loss.1} parent=0 // pred_fallthru
    _
  %s25 = sadd.s32 0, 0
  %p26 = scmp.lt.s32.totalorder %s25, 0
  %s27 = scalar_select %p26, %s25, 0
  %s28 = smul.addr %s27, 4
  %s29 = scalar_lea.vmem %s0, %s28
  %s30 = sadd.s32 0, 0
  %p31 = scmp.lt.s32.totalorder %s30, 0
  %s32 = scalar_select %p31, %s30, 0
  %s33 = scalar_lea.vmem %s1, %s32
  %s34 = sadd.s32 0, 0
  %p35 = scmp.lt.s32.totalorder %s34, 0
  %s36 = scalar_select %p35, %s34, 0
  %s37 = smul.addr %s36, 4
  %s38 = scalar_lea.vmem %s0, %s37
  %s39 = sadd.s32 0, 0
  %s40 = sadd.s32 0, 0
  %p41 = scmp.lt.s32.totalorder %s40, 0
  %s42 = scalar_select %p41, %s40, 0
  %s43 = scalar_lea.vmem %s1, %s42
  %s44 = sadd.s32 0, 0
  %p45 = scmp.eq.s32.totalorder 0, 0
  // Predicated region
  $region14: #{focal_loss.1} parent=0 // pred_check
    %p46 = pneg %p45
  $region15: #{focal_loss.1} parent=0 // pred_check_branch
    %48 = sbr.rel (%p46) target = $region17
  $region16: #{focal_loss.1} parent=0 // pred_region
    %49 = vst [vmem:[%s3] sm:$0x1] 0.0
  $region17: #{focal_loss.1} parent=0 // pred_fallthru
    _
  %v50 = vld [vmem:[%s38] sm:$0x7]
  %v51 = vld [vmem:[%s43] sm:$0x1]
  %v52 = vld [vmem:[%s2] sm:$0x7]
  %vm53 = vcmask 1042432
  %v54 = vsel %vm53, %v50, -inf
  %v55 = vrot.slane %v54, 4
  %v56 = vmax.f32 %v54, %v55
  %v57 = vrot.slane %v56, 2
  %v58 = vmax.f32 %v56, %v57
  %v59 = vrot.slane %v58, 1
  %v60 = vmax.f32 %v58, %v59
  %v61 = vsub.f32 %v50, %v60
  %v62 = vmul.f32 %v61, 1.442695
  %v63 = vpow.pop %v62
  %v64 = vsel %vm53, %v63, 0.0
  %v65 = vrot.slane %v64, 4
  %v66 = vadd.f32 %v64, %v65
  %v67 = vrot.slane %v66, 2
  %v68 = vadd.f32 %v66, %v67
  %v69 = vrot.slane %v68, 1
  %v70 = vadd.f32 %v68, %v69
  %v71 = vlog2.pop %v70
  %v72 = vmul.f32 %v71, 0.6931472
  %v73 = vlaneseq
  %v74 = vshrl.u32 %v73, 7
  %v75 = vlaneseq
  %v76 = vshrl.u32 %v75, 7
  %v77 = vsub.s32 0, %v76
  %v78 = vrot.slane %v51, %v77
  %vm79 = vcmp.eq.s32.totalorder %v74, %v78
  %v80 = vsel %vm79, %v61, 0.0
  %v81 = vsel %vm53, %v80, 0.0
  %v82 = vrot.slane %v81, 4
  %v83 = vadd.f32 %v81, %v82
  %v84 = vrot.slane %v83, 2
  %v85 = vadd.f32 %v83, %v84
  %v86 = vrot.slane %v85, 1
  %v87 = vadd.f32 %v85, %v86
  %v88 = vsel %vm79, %v63, 0.0
  %v89 = vsel %vm53, %v88, 0.0
  %v90 = vrot.slane %v89, 4
  %v91 = vadd.f32 %v89, %v90
  %v92 = vrot.slane %v91, 2
  %v93 = vadd.f32 %v91, %v92
  %v94 = vrot.slane %v93, 1
  %v95 = vadd.f32 %v93, %v94
  %97 = vset.pattern.permute.xlu0 0
  %98 = vperm.xlu0 %97, %v52
  %v99 = vpop.permute.xlu0 %98
  %v101 = vsel %vm79, %v99, 0.0
  %v102 = vsel %vm53, %v101, 0.0
  %v103 = vrot.slane %v102, 4
  %v104 = vadd.f32 %v102, %v103
  %v105 = vrot.slane %v104, 2
  %v106 = vadd.f32 %v104, %v105
  %v107 = vrot.slane %v106, 1
  %v108 = vadd.f32 %v106, %v107
  %v109 = vsub.f32 %v87, %v72
  %v110 = vrcp.pop %v70
  %v111 = vmul.f32 %v95, %v110
  %v112 = vsub.f32 0.0, %v108
  %v113 = vmul.f32 %v112, %v109
  %v114 = vsub.f32 1.0, %v111
  %v115 = vmax.f32 %v114, 0.0
  %v116 = vmul.f32 %v115, %v115
  %v117 = vmul.f32 %v116, %v113
  %v118 = vld [vmem:[%s3] sm:$0x1]
  %v119 = vadd.f32 %v118, %v117
  %120 = vst [vmem:[%s3] sm:$0x1] %v119
  // Predicated region
  $region18: #{focal_loss.1} parent=0 // pred_check
    _
  $region19: #{focal_loss.1} parent=0 // pred_check_branch
    %122 = sbr.rel (0) target = $region21
  $region20: #{focal_loss.1} parent=0 // pred_region
    _
  $region21: #{focal_loss.1} parent=0 // pred_fallthru
    _
  // Predicated region
  $region22: #{focal_loss.1} parent=0 // pred_check
    _
  $region23: #{focal_loss.1} parent=0 // pred_check_branch
    %124 = sbr.rel (0) target = $region25
  $region24: #{focal_loss.1} parent=0 // pred_region
    _
  $region25: #{focal_loss.1} parent=0 // pred_fallthru
    _

</llo_original>
